<compile_context>
chip_gen: v6e
topology: v6e:2x2x1
jax: 0.10.0
libtpu: 0.0.40
codegen_flags: <defaults>
</compile_context>

<pallas_src>
import jax
import jax.numpy as jnp
from jax.experimental import pallas as pl
from jax.experimental.pallas import tpu as pltpu


def _hbm_copy_kernel(x_hbm_ref, o_hbm_ref, sem):
    # One engine-level HBM->HBM DMA over the whole (contiguous, identically
    # shaped/laid-out) array.  No VMEM staging, no per-tile overhead.
    cp = pltpu.make_async_copy(x_hbm_ref, o_hbm_ref, sem)
    cp.start()
    cp.wait()


def _hbm_copy(x):
    """Identity copy of `x` via a single HBM->HBM DMA inside a Pallas kernel."""
    nbytes = x.size * jnp.dtype(x.dtype).itemsize
    return pl.pallas_call(
        _hbm_copy_kernel,
        out_shape=jax.ShapeDtypeStruct(x.shape, x.dtype),
        in_specs=[pl.BlockSpec(memory_space=pl.ANY)],
        out_specs=pl.BlockSpec(memory_space=pl.ANY),
        scratch_shapes=[pltpu.SemaphoreType.DMA(())],
        cost_estimate=pl.CostEstimate(
            flops=0, transcendentals=0, bytes_accessed=2 * nbytes
        ),
    )(x)


def im2video(x, time_dim: int = 2):
    """JAX/Pallas equivalent of Im2Video.forward (time_dim=2, NCTHW)."""
    if time_dim != 2:
        # The reference module is only ever used with time_dim=2 (NCTHW).
        raise NotImplementedError("Only time_dim=2 (NCTHW) is supported.")
    if x.ndim == 5:
        # Module returns the input unchanged: no kernel, no copy.
        return x
    if x.ndim == 4:
        B, C, H, W = x.shape
        # The unsqueeze is a free, layout-preserving metadata reshape (the
        # size-1 T dim sits in front of the tiled H/W dims).  The Pallas
        # kernel then performs the (mandated) data movement as one DMA and
        # directly produces the (B, C, 1, H, W) result.
        x5 = x.reshape(B, C, 1, H, W)
        return _hbm_copy(x5)
    raise ValueError(f"Dimension incorrect {x.shape}")


if __name__ == "__main__":
    key = jax.random.PRNGKey(0)
    k4, k5, k6 = jax.random.split(key, 3)

    # 4D image input: (B, C, H, W) = (2, 4, 16, 16) -> (2, 4, 1, 16, 16)
    x4 = jax.random.normal(k4, (2, 4, 16, 16), dtype=jnp.float32)
    y4 = jax.block_until_ready(im2video(x4))
    assert y4.shape == (2, 4, 1, 16, 16), y4.shape
    assert y4.dtype == x4.dtype
    assert bool(jnp.array_equal(y4, x4[:, :, None, :, :]))

    # 4D bf16 input with awkward (non-128-divisible) sizes: the DMA path has
    # no tiling/packing constraints, so this goes through the same kernel.
    xb = jax.random.normal(k6, (1, 3, 7, 5), dtype=jnp.bfloat16)
    yb = jax.block_until_ready(im2video(xb))
    assert yb.shape == (1, 3, 1, 7, 5), yb.shape
    assert yb.dtype == xb.dtype
    assert bool(jnp.array_equal(yb, xb[:, :, None, :, :]))

    # 5D video input: (B, C, T, H, W) = (2, 4, 3, 16, 16) -> unchanged (no copy)
    x5 = jax.random.normal(k5, (2, 4, 3, 16, 16), dtype=jnp.float32)
    y5 = jax.block_until_ready(im2video(x5))
    assert y5.shape == x5.shape
    assert bool(jnp.array_equal(y5, x5))

    print("KERNEL_OK")
</pallas_src>

<mosaic_0001>
module attributes {stable_mosaic.version = 11 : i64} {
  func.func @_hbm_copy_kernel(%arg0: memref<2x4x1x16x16xf32, #tpu.memory_space<any>>, %arg1: memref<2x4x1x16x16xf32, #tpu.memory_space<any>>, %arg2: memref<!tpu.dma_semaphore, #tpu.memory_space<semaphore_mem>>) attributes {dimension_semantics = [], scalar_prefetch = 0 : i64, scratch_operands = 1 : i64, tpu.core_type = #tpu.core_type<tc>} {
    tpu.enqueue_dma source(%arg0 : memref<2x4x1x16x16xf32, #tpu.memory_space<any>>) target(%arg1 : memref<2x4x1x16x16xf32, #tpu.memory_space<any>>) target_semaphore(%arg2 : memref<!tpu.dma_semaphore, #tpu.memory_space<semaphore_mem>>)
    tpu.wait_dma2 semaphore(%arg2 : memref<!tpu.dma_semaphore, #tpu.memory_space<semaphore_mem>>) src(%arg0 : memref<2x4x1x16x16xf32, #tpu.memory_space<any>>) dst(%arg1 : memref<2x4x1x16x16xf32, #tpu.memory_space<any>>)
    return
  }
}

</mosaic_0001>

<llo_original>
// kernel: tpu_custom_call.1
$region0: #{tpu_custom_call.1}
  #allocation0 [shape = 'u32[]', space=smem, size = 0x4, offset = 0x4, fixed_abs, tag = 'smem constant byte address 0x4 - core index']
  #allocation1 [shape = 'u32[144,128]{1,0:T(1,128)}', space=vmem, size = 0x12000, scoped, tag = 'internal scratch']
  #allocation2 [shape = 's32[1]{0}', space=sflag, size = 0x4, scoped, tag = 'scratch operand']
  #allocation3 [shape = 's32[]', space=sflag, size = 0x4, offset = 0, fixed_abs, tag = 'sflag constant byte address 0x0 - dummy sync flag']
  #allocation4 [shape = 'u32[0]{0}', space=smem, size = 0, offset = 0, fixed_abs, tag = 'smem constant byte address 0x0 - null']
  %s0 = inlined_call_operand.hbm [shape: f32[2,4,1,16,16], index: 0, kind: input, shape index: {}]
  %s1 = inlined_call_operand.hbm [shape: f32[2,4,1,16,16], index: 1, kind: output, shape index: {}]
  %s2 = sld [smem:[#allocation0]]
  $region2: #{tpu_custom_call.1} parent=0
    _
  %s4 = ssub.s32 1, %s2
  %s5 = scalar_select 0, %s4, %s2
  %s7 = sshll.u32 1, 14
  %s8 = sxor.u32 4294967295, %s7
  %12 = dma.general %s0, 2048, %s1, [#allocation2], 131072, [#allocation4], 0, 0
  %s13 = smul.u32 2, 4
  %s14 = smul.u32 %s13, 1
  %s15 = smul.u32 %s14, 16
  %s16 = smul.u32 %s15, 1
  %s17 = sshll.u32 %s16, 4
  %18 = dma.done [#allocation2], %s17
  %19 = vsyncmov [#allocation2]
  %s20 = vpop.sfrf %19
  %p21 = scmp.eq.s32.totalorder %s20, 0
  %p22 = pneg %p21
  %24 = shalt.err (%p22)

</llo_original>
